<compile_context>
chip_gen: v7x
topology: tpu7x:2x2x1
jax: 0.10.0
libtpu: 0.0.40
codegen_flags: <defaults>
</compile_context>

<pallas_src>
import functools

import jax
import jax.numpy as jnp
from jax.experimental import pallas as pl
from jax.experimental.pallas import tpu as pltpu


def _round_up(v, m):
    return ((v + m - 1) // m) * m


# ---------------------------------------------------------------------------
# Kernel: fused linear + bias + activation on one (tm, K) x (K, N) tile.
# ---------------------------------------------------------------------------
def siren_kernel(x_ref, w_ref, b_ref, o_ref, *, w0, activation):
    # MXU matmul with f32 accumulation
    y = jnp.dot(x_ref[...], w_ref[...], preferred_element_type=jnp.float32)
    y = y + b_ref[...]
    if activation == "sine":
        o_ref[...] = jnp.sin(w0 * y)
    elif activation == "relu":
        o_ref[...] = jnp.maximum(y, 0.0)
    elif activation == "sigmoid":
        o_ref[...] = jax.nn.sigmoid(y)
    else:  # 'id'
        o_ref[...] = y


# ---------------------------------------------------------------------------
# Wrapper: pad to lane/sublane-friendly shapes, one fused pallas_call,
# slice the padding back off.
# ---------------------------------------------------------------------------
def siren_forward(x, weight, bias=None, *, w0=1.0, activation="sine"):
    m, k = x.shape
    n, k_w = weight.shape
    assert k == k_w, "weight must be (dim_out, dim_in)"

    # Row (sublane) tiling: one block for small batches, 512-row tiles
    # sharded "parallel" across TensorCores for large ones.
    if m <= 512:
        tm = _round_up(m, 8)
        m_pad = tm
    else:
        tm = 512
        m_pad = _round_up(m, tm)
    k_pad = _round_up(k, 128)   # lane-dense contraction dim
    n_pad = _round_up(n, 128)   # lane-dense output dim -> unmasked stores

    f32 = jnp.float32
    x_p = jnp.zeros((m_pad, k_pad), f32).at[:m, :k].set(x.astype(f32))
    w_p = jnp.zeros((k_pad, n_pad), f32).at[:k, :n].set(weight.T.astype(f32))
    b_p = jnp.zeros((1, n_pad), f32)
    if bias is not None:
        b_p = b_p.at[0, :n].set(bias.astype(f32))

    kernel = functools.partial(siren_kernel, w0=float(w0), activation=activation)
    out_p = pl.pallas_call(
        kernel,
        out_shape=jax.ShapeDtypeStruct((m_pad, n_pad), f32),
        grid=(m_pad // tm,),
        in_specs=[
            pl.BlockSpec((tm, k_pad), lambda i: (i, 0)),      # x row tile
            pl.BlockSpec((k_pad, n_pad), lambda i: (0, 0)),   # W^T (resident)
            pl.BlockSpec((1, n_pad), lambda i: (0, 0)),       # bias (resident)
        ],
        out_specs=pl.BlockSpec((tm, n_pad), lambda i: (i, 0)),
        compiler_params=pltpu.CompilerParams(
            dimension_semantics=("parallel",)),
    )(x_p, w_p, b_p)
    return out_p[:m, :n]


# ---------------------------------------------------------------------------
# Parameter init matching the PyTorch Siren module's init_().
# ---------------------------------------------------------------------------
def init_siren_params(key, dim_in, dim_out, *, w0=1.0, c=6.0, is_first=False,
                      use_bias=True, activation="sine"):
    if activation == "relu":
        w_std = (1.0 / dim_in) ** 0.5
    else:
        w_std = (1.0 / dim_in) if is_first else ((c / dim_in) ** 0.5) / w0
    kw, kb = jax.random.split(key)
    weight = jax.random.uniform(kw, (dim_out, dim_in), jnp.float32, -w_std, w_std)
    bias = (jax.random.uniform(kb, (dim_out,), jnp.float32, -w_std, w_std)
            if use_bias else None)
    return weight, bias


if __name__ == "__main__":
    key = jax.random.PRNGKey(0)

    batch = 16
    dim_in = 4
    dim_out = 32
    w0 = 1.0
    activation = "sine"

    key, xk, pk = jax.random.split(key, 3)
    x = jax.random.normal(xk, (batch, dim_in), jnp.float32)
    weight, bias = init_siren_params(pk, dim_in, dim_out, w0=w0, c=6.0,
                                     is_first=False, use_bias=True,
                                     activation=activation)

    out = siren_forward(x, weight, bias, w0=w0, activation=activation)
    out = jax.block_until_ready(out)

    # pure-JAX reference of the same forward pass
    ref = jnp.sin(w0 * (x @ weight.T + bias[None, :]))

    assert out.shape == (batch, dim_out)
    assert bool(jnp.all(jnp.isfinite(out)))
    assert bool(jnp.allclose(out, ref, atol=1e-3, rtol=1e-3)), \
        float(jnp.max(jnp.abs(out - ref)))
    print("KERNEL_OK")
</pallas_src>

<mosaic_0001>
module attributes {stable_mosaic.version = 11 : i64} {
  func.func @siren_kernel(%arg0: i32, %arg1: memref<16x128xf32, #tpu.memory_space<vmem>>, %arg2: memref<128x128xf32, #tpu.memory_space<vmem>>, %arg3: memref<1x128xf32, #tpu.memory_space<vmem>>, %arg4: memref<16x128xf32, #tpu.memory_space<vmem>>) attributes {dimension_semantics = [#tpu.dimension_semantics<parallel>], iteration_bounds = array<i64: 1>, scalar_prefetch = 0 : i64, scratch_operands = 0 : i64, tpu.core_type = #tpu.core_type<tc>, window_params = [{transform_indices = @transform_0, window_bounds = array<i64: 16, 128>}, {pipeline_mode = #tpu.pipeline_mode<synchronous>, transform_indices = @transform_1, window_bounds = array<i64: 128, 128>}, {pipeline_mode = #tpu.pipeline_mode<synchronous>, transform_indices = @transform_2, window_bounds = array<i64: 1, 128>}, {transform_indices = @transform_3, window_bounds = array<i64: 16, 128>}]} {
    %c0 = arith.constant 0 : index
    %c0_0 = arith.constant 0 : index
    %0 = vector.load %arg1[%c0, %c0_0] : memref<16x128xf32, #tpu.memory_space<vmem>>, vector<16x128xf32>
    %c0_1 = arith.constant 0 : index
    %c0_2 = arith.constant 0 : index
    %1 = vector.load %arg2[%c0_1, %c0_2] : memref<128x128xf32, #tpu.memory_space<vmem>>, vector<128x128xf32>
    %cst = arith.constant dense<0.000000e+00> : vector<16x128xf32>
    %2 = tpu.matmul %0, %1, %cst {dimension_numbers = #tpu.dot_dimension_numbers<[1], [0], [0], [1], [0, 0, 1, 1], [], []>} : vector<16x128xf32>, vector<128x128xf32>, vector<16x128xf32> -> vector<16x128xf32>
    %c0_3 = arith.constant 0 : index
    %c0_4 = arith.constant 0 : index
    %3 = vector.load %arg3[%c0_3, %c0_4] : memref<1x128xf32, #tpu.memory_space<vmem>>, vector<1x128xf32>
    %4 = vector.broadcast %3 : vector<1x128xf32> to vector<16x128xf32>
    %5 = arith.addf %2, %4 : vector<16x128xf32>
    %cst_5 = arith.constant 1.000000e+00 : f32
    %6 = vector.broadcast %cst_5 : f32 to vector<16x128xf32>
    %7 = arith.mulf %6, %5 : vector<16x128xf32>
    %8 = math.sin %7 : vector<16x128xf32>
    %c0_6 = arith.constant 0 : index
    %c0_7 = arith.constant 0 : index
    %9 = vector.load %arg4[%c0_6, %c0_7] : memref<16x128xf32, #tpu.memory_space<vmem>>, vector<16x128xf32>
    tpu.vector_store %arg4[%c0_6, %c0_7], %8 {strides = array<i32>} : memref<16x128xf32, #tpu.memory_space<vmem>>, vector<16x128xf32>,
    return
  }
  func.func @transform_0(%arg0: i32) -> (i32, i32) {
    %c0_i32 = arith.constant 0 : i32
    %c0_i32_0 = arith.constant 0 : i32
    return %arg0, %c0_i32 : i32, i32
  }
  func.func @transform_1(%arg0: i32) -> (i32, i32) {
    %c0_i32 = arith.constant 0 : i32
    %c0_i32_0 = arith.constant 0 : i32
    %c0_i32_1 = arith.constant 0 : i32
    return %c0_i32, %c0_i32_0 : i32, i32
  }
  func.func @transform_2(%arg0: i32) -> (i32, i32) {
    %c0_i32 = arith.constant 0 : i32
    %c0_i32_0 = arith.constant 0 : i32
    %c0_i32_1 = arith.constant 0 : i32
    return %c0_i32, %c0_i32_0 : i32, i32
  }
  func.func @transform_3(%arg0: i32) -> (i32, i32) {
    %c0_i32 = arith.constant 0 : i32
    %c0_i32_0 = arith.constant 0 : i32
    return %arg0, %c0_i32 : i32, i32
  }
}

</mosaic_0001>

<llo_original>
// kernel: tpu_custom_call.1
$region0: #{tpu_custom_call.1}
  #allocation0 [shape = 'u32[]', space=smem, size = 0x4, offset = 0x4, fixed_abs, tag = 'smem constant byte address 0x4 - core index']
  #allocation1 [shape = 'u32[144,128]{1,0:T(1,128)}', space=vmem, size = 0x12000, scoped, tag = 'internal scratch']
  %s0 = inlined_call_operand.hbm [shape: f32[16,128], index: 0, kind: input, shape index: {}]
  %s1 = inlined_call_operand.hbm [shape: f32[128,128], index: 1, kind: input, shape index: {}]
  %s2 = inlined_call_operand.vmem [shape: f32[1,128], index: 2, kind: input, shape index: {}]
  %s3 = inlined_call_operand.hbm [shape: f32[16,128], index: 3, kind: output, shape index: {}]
  %s4 = sld [smem:[#allocation0]]
  $region30: #{tpu_custom_call.1} parent=0
    _
  %s6 = ssub.s32 1, %s4
  %s7 = scalar_select 0, %s6, %s4
  $region1: #{tpu_custom_call.1} parent=0
    #allocation2 [shape = 'u8[8192]{0}', space=vmem, size = 0x2000, scoped, tag = 'input window, operand 0, single buffered']
    #allocation3 [shape = 's32[1]{0}', space=sflag, size = 0x4, scoped, tag = 'scoped memory for tpu_custom_call.1']
    #allocation4 [shape = 's32[1]{0}', space=sflag, size = 0x4, scoped, tag = 'scoped memory for tpu_custom_call.1']
    #allocation5 [shape = 'u8[65536]{0}', space=vmem, size = 0x10000, scoped, tag = 'input window, operand 1, single buffered']
    #allocation6 [shape = 's32[1]{0}', space=sflag, size = 0x4, scoped, tag = 'scoped memory for tpu_custom_call.1']
    #allocation7 [shape = 'u8[8192]{0}', space=vmem, size = 0x2000, scoped, tag = 'output window, operand 0, single buffered']
    %8 = vsyncpa [#allocation3], 0
    %9 = vsyncpa [#allocation6], 0
    %10 = vsyncpa [#allocation4], 0
    // Predicated region
    $region2: #{tpu_custom_call.1} parent=1 // pred_check
      _
    $region3: #{tpu_custom_call.1} parent=1 // pred_check_branch
      %12 = sbr.rel (0) target = $region5
    $region4: #{tpu_custom_call.1} parent=1 // pred_region
      %s14 = ssub.s32 256, 256
      %15 = vsyncadd [#allocation3], %s14
      %s16 = sshll.u32 [#allocation2], 4
      %s17 = int_to_ptr.vmem [resolvable:$true] %s16
      %22 = dma.hbm_to_vmem [thread:$0]  %s0, 256, %s17, [#allocation3], 128, 128, 8
    $region5: #{tpu_custom_call.1} parent=1 // pred_fallthru
      _
    // Predicated region
    $region6: #{tpu_custom_call.1} parent=1 // pred_check
      _
    $region7: #{tpu_custom_call.1} parent=1 // pred_check_branch
      %24 = sbr.rel (0) target = $region9
    $region8: #{tpu_custom_call.1} parent=1 // pred_region
      %s26 = ssub.s32 2048, 2048
      %27 = vsyncadd [#allocation6], %s26
      %s28 = sshll.u32 [#allocation5], 4
      %s29 = int_to_ptr.vmem [resolvable:$true] %s28
      %34 = dma.hbm_to_vmem [thread:$0]  %s1, 2048, %s29, [#allocation6], 128, 128, 8
    $region9: #{tpu_custom_call.1} parent=1 // pred_fallthru
      _
    // Predicated region
    $region10: #{tpu_custom_call.1} parent=1 // pred_check
      _
    $region11: #{tpu_custom_call.1} parent=1 // pred_check_branch
      %36 = sbr.rel (0) target = $region13
    $region12: #{tpu_custom_call.1} parent=1 // pred_region
      _
    $region13: #{tpu_custom_call.1} parent=1 // pred_fallthru
      _
    // Predicated region
    $region14: #{tpu_custom_call.1} parent=1 // pred_check
      _
    $region15: #{tpu_custom_call.1} parent=1 // pred_check_branch
      %38 = sbr.rel (0) target = $region17
    $region16: #{tpu_custom_call.1} parent=1 // pred_region
      %39 = dma.done [#allocation3], 256
    $region17: #{tpu_custom_call.1} parent=1 // pred_fallthru
      _
    // Predicated region
    $region18: #{tpu_custom_call.1} parent=1 // pred_check
      _
    $region19: #{tpu_custom_call.1} parent=1 // pred_check_branch
      %41 = sbr.rel (0) target = $region21
    $region20: #{tpu_custom_call.1} parent=1 // pred_region
      %42 = dma.done [#allocation6], 2048
    $region21: #{tpu_custom_call.1} parent=1 // pred_fallthru
      _
    %v43 = vld [vmem:[#allocation2] sm:$0xff]
    %v44 = vld [vmem:[#allocation2 + $0x8] sm:$0xff]
    %v45 = vld [vmem:[#allocation5] sm:$0xff]
    %v46 = vld [vmem:[#allocation5 + $0x8] sm:$0xff]
    %v47 = vld [vmem:[#allocation5 + $0x10] sm:$0xff]
    %v48 = vld [vmem:[#allocation5 + $0x18] sm:$0xff]
    %v49 = vld [vmem:[#allocation5 + $0x20] sm:$0xff]
    %v50 = vld [vmem:[#allocation5 + $0x28] sm:$0xff]
    %v51 = vld [vmem:[#allocation5 + $0x30] sm:$0xff]
    %v52 = vld [vmem:[#allocation5 + $0x38] sm:$0xff]
    %v53 = vld [vmem:[#allocation5 + $0x40] sm:$0xff]
    %v54 = vld [vmem:[#allocation5 + $0x48] sm:$0xff]
    %v55 = vld [vmem:[#allocation5 + $0x50] sm:$0xff]
    %v56 = vld [vmem:[#allocation5 + $0x58] sm:$0xff]
    %v57 = vld [vmem:[#allocation5 + $0x60] sm:$0xff]
    %v58 = vld [vmem:[#allocation5 + $0x68] sm:$0xff]
    %v59 = vld [vmem:[#allocation5 + $0x70] sm:$0xff]
    %v60 = vld [vmem:[#allocation5 + $0x78] sm:$0xff]
    %v61 = vld [vmem:[%s2] sm:$0x1]
    %v63 = vlaneseq
    %v64 = vshrl.u32 %v63, 7
    %v65 = vsub.s32 0, %v64
    %v66 = vrot.slane %v61, %v65
    %68 = vmatprep.subr.mxu0 0.0
    %69 = vmatpush1.msra.mxu0 %v45
    %70 = vmatprep.subr.mxu0 0.0
    %71 = vmatpush1.msra.mxu0 %v46
    %72 = vmatprep.subr.mxu0 0.0
    %73 = vmatpush1.msra.mxu0 %v47
    %74 = vmatprep.subr.mxu0 0.0
    %75 = vmatpush1.msra.mxu0 %v48
    %76 = vmatprep.subr.mxu0 0.0
    %77 = vmatpush1.msra.mxu0 %v49
    %78 = vmatprep.subr.mxu0 0.0
    %79 = vmatpush1.msra.mxu0 %v50
    %80 = vmatprep.subr.mxu0 0.0
    %81 = vmatpush1.msra.mxu0 %v51
    %82 = vmatprep.subr.mxu0 0.0
    %83 = vmatpush1.msra.mxu0 %v52
    %84 = vmatprep.subr.mxu0 0.0
    %85 = vmatpush1.msra.mxu0 %v53
    %86 = vmatprep.subr.mxu0 0.0
    %87 = vmatpush1.msra.mxu0 %v54
    %88 = vmatprep.subr.mxu0 0.0
    %89 = vmatpush1.msra.mxu0 %v55
    %90 = vmatprep.subr.mxu0 0.0
    %91 = vmatpush1.msra.mxu0 %v56
    %92 = vmatprep.subr.mxu0 0.0
    %93 = vmatpush1.msra.mxu0 %v57
    %94 = vmatprep.subr.mxu0 0.0
    %95 = vmatpush1.msra.mxu0 %v58
    %96 = vmatprep.subr.mxu0 0.0
    %97 = vmatpush1.msra.mxu0 %v59
    %98 = vmatprep.subr.mxu0 0.0
    %99 = vmatpush1.msra.mxu0 %v60
    %100 = vmatprep.subr.mxu0 0.0
    %101 = vmatpush1.msra.mxu0 0.0
    %102 = vmatprep.subr.mxu0 0.0
    %103 = vmatpush1.msra.mxu0 0.0
    %104 = vmatprep.subr.mxu0 0.0
    %105 = vmatpush1.msra.mxu0 0.0
    %106 = vmatprep.subr.mxu0 0.0
    %107 = vmatpush1.msra.mxu0 0.0
    %108 = vmatprep.subr.mxu0 0.0
    %109 = vmatpush1.msra.mxu0 0.0
    %110 = vmatprep.subr.mxu0 0.0
    %111 = vmatpush1.msra.mxu0 0.0
    %112 = vmatprep.subr.mxu0 0.0
    %113 = vmatpush1.msra.mxu0 0.0
    %114 = vmatprep.subr.mxu0 0.0
    %115 = vmatpush1.msra.mxu0 0.0
    %116 = vmatprep.subr.mxu0 0.0
    %117 = vmatpush1.msra.mxu0 0.0
    %118 = vmatprep.subr.mxu0 0.0
    %119 = vmatpush1.msra.mxu0 0.0
    %120 = vmatprep.subr.mxu0 0.0
    %121 = vmatpush1.msra.mxu0 0.0
    %122 = vmatprep.subr.mxu0 0.0
    %123 = vmatpush1.msra.mxu0 0.0
    %124 = vmatprep.subr.mxu0 0.0
    %125 = vmatpush1.msra.mxu0 0.0
    %126 = vmatprep.subr.mxu0 0.0
    %127 = vmatpush1.msra.mxu0 0.0
    %128 = vmatprep.subr.mxu0 0.0
    %129 = vmatpush1.msra.mxu0 0.0
    %130 = vmatprep.subr.mxu0 0.0
    %131 = vmatpush1.msra.mxu0 0.0
    %132 = vmatprep.mubr.f32.mxu0 0.0
    %133 = vmatmul.mubr.f32.gmra.mrb[0].mxu0 %v43
    %v134 = vpop.f32.mrb[0].mxu0
    %v135 = vadd.f32 %v66, %v134
    %v136 = vpop.f32.mrb[0].mxu0
    %137 = vmatprep.mubr.f32.mxu0 0.0
    %138 = vmatmul.mubr.f32.gmra.mrb[0].mxu0 %v44
    %v139 = vpop.f32.mrb[0].mxu0
    %v140 = vadd.f32 %v66, %v139
    %v141 = vpop.f32.mrb[0].mxu0
    %142 = vdwg.mxu0
    %v143 = vand.u32 2147483647, %v135
    %vm144 = vcmp.le.f32.partialorder %v143, 0.7853982
    %vm145 = vcmp.lt.s32.totalorder %v135, 0
    %v146 = vand.u32 %v135, 2139095040
    %v147 = vshrl.u32 %v146, 23
    %v148 = vsub.s32 %v147, 127
    %v149 = vand.u32 2147483647, %v135
    %v150 = vand.u32 %v149, 8388607
    %v151 = vor.u32 %v150, 8388608
    %v152 = vsub.s32 0, %v151
    %v153 = vadd.s32 %v148, 1
    %vm154 = vcmp.gt.s32.totalorder %v153, 0
    %v155 = vsel %vm154, %v153, 0
    %v156 = vshrl.u32 %v155, 5
    %v157 = vand.u32 %v155, 31
    %v158 = vsub.s32 32, %v157
    %v159 = vshrl.u32 683565275, %v158
    %v160 = vshll.u32 683565275, %v157
    %v161 = vshrl.u32 2475754826, %v158
    %v162 = vor.u32 %v160, %v161
    %v163 = vshll.u32 2475754826, %v157
    %v164 = vshrl.u32 2131351028, %v158
    %v165 = vor.u32 %v163, %v164
    %v166 = vshll.u32 2131351028, %v157
    %v167 = vshrl.u32 2102212464, %v158
    %v168 = vor.u32 %v166, %v167
    %v169 = vshll.u32 2102212464, %v157
    %v170 = vshrl.u32 920167782, %v158
    %v171 = vor.u32 %v169, %v170
    %v172 = vshll.u32 920167782, %v157
    %v173 = vshrl.u32 1326507024, %v158
    %v174 = vor.u32 %v172, %v173
    %vm175 = vcmp.lt.s32.totalorder %v156, 1
    %vm176 = vcmp.lt.s32.totalorder %v156, 2
    %vm177 = vcmp.lt.s32.totalorder %v156, 3
    %vm178 = vcmp.lt.s32.totalorder %v156, 4
    %v179 = vsel %vm175, %v159, %v162
    %v180 = vsel %vm178, %v168, 2102212464
    %v181 = vsel %vm177, %v165, %v180
    %v182 = vsel %vm176, %v179, %v181
    %v183 = vsel %vm175, %v162, %v165
    %v184 = vsel %vm178, %v171, 920167782
    %v185 = vsel %vm177, %v168, %v184
    %v186 = vsel %vm176, %v183, %v185
    %v187 = vsel %vm175, %v165, %v168
    %v188 = vsel %vm178, %v174, 1326507024
    %v189 = vsel %vm177, %v171, %v188
    %v190 = vsel %vm176, %v187, %v189
    %v191 = vshll.u32 %v151, 8
    %v192 = vmul.u32.u64.compose %v191, %v190
    %v193 = vextract.low.u32 %v192
    %v194 = vextract.high.u32 %v192
    %v195 = vmul.u32.u64.compose %v191, %v186
    %v196 = vextract.low.u32 %v195
    %v197 = vextract.high.u32 %v195
    %v198 = vmul.u32 %v191, %v182
    %v199 = vadd.s32 %v194, %v196
    %vm200 = vc.u32 %v194, %v196
    %v201 = vadd.s32 %v197, 1
    %v202 = vsel %vm200, %v201, %v197
    %v203 = vadd.s32 %v198, %v202
    %v204 = vadd.s32 %v203, 536870912
    %v205 = vshrl.u32 %v204, 30
    %v206 = vshll.u32 %v205, 30
    %v207 = vsub.s32 %v203, %v206
    %vm208 = vcmp.lt.s32.totalorder %v207, 0
    %v209 = vsub.s32 0, %v207
    %v210 = vsel %vm208, %v209, %v207
    %v211 = vclz %v210
    %v212 = vsub.s32 %v211, 2
    %vm213 = vcmp.gt.s32.totalorder 0, %v212
    %v214 = vsel %vm213, 0, %v212
    %v215 = vsub.s32 32, %v214
    %v216 = vshll.u32 %v207, %v214
    %v217 = vshrl.u32 %v199, %v215
    %v218 = vor.u32 %v216, %v217
    %v219 = vsub.s32 4294967266, %v214
    %v220 = vadd.s32 %v219, 127
    %v221 = vshll.u32 %v220, 23
    %v222 = vor.u32 4788187, %v221
    %v223 = vand.u32 2147483647, %v222
    %v225 = vcvt.s32.f32 %v218
    %v226 = vmul.f32 %v225, %v223
    %v227 = vxor.u32 %v226, 2147483648
    %v228 = vsel %vm145, %v227, %v226
    %v229 = vsub.s32 4, %v205
    %v230 = vsel %vm145, %v229, %v205
    %v231 = vsel %vm144, %v135, %v228
    %v232 = vsel %vm144, 0, %v230
    %v233 = vcosq.f32.pop %v231
    %v234 = vsinq.f32.pop %v231
    %vm235 = vweird.f32 %v135
    %v236 = vadd.s32 %v232, 3
    %v237 = vand.u32 %v236, 3
    %vm238 = vcmp.lt.s32.totalorder %v237, 2
    %vm239 = vcmp.eq.s32.totalorder %v237, 0
    %v240 = vxor.u32 %v234, 2147483648
    %v241 = vsel %vm239, %v233, %v240
    %vm242 = vcmp.eq.s32.totalorder %v237, 2
    %v243 = vxor.u32 %v233, 2147483648
    %v244 = vsel %vm242, %v243, %v234
    %v245 = vsel %vm238, %v241, %v244
    %v246 = vsel %vm235, nan, %v245
    %v247 = vand.u32 2147483647, %v140
    %vm248 = vcmp.le.f32.partialorder %v247, 0.7853982
    %vm249 = vcmp.lt.s32.totalorder %v140, 0
    %v250 = vand.u32 %v140, 2139095040
    %v251 = vshrl.u32 %v250, 23
    %v252 = vsub.s32 %v251, 127
    %v253 = vand.u32 2147483647, %v140
    %v254 = vand.u32 %v253, 8388607
    %v255 = vor.u32 %v254, 8388608
    %v256 = vsub.s32 0, %v255
    %v257 = vadd.s32 %v252, 1
    %vm258 = vcmp.gt.s32.totalorder %v257, 0
    %v259 = vsel %vm258, %v257, 0
    %v260 = vshrl.u32 %v259, 5
    %v261 = vand.u32 %v259, 31
    %v262 = vsub.s32 32, %v261
    %v263 = vshrl.u32 683565275, %v262
    %v264 = vshll.u32 683565275, %v261
    %v265 = vshrl.u32 2475754826, %v262
    %v266 = vor.u32 %v264, %v265
    %v267 = vshll.u32 2475754826, %v261
    %v268 = vshrl.u32 2131351028, %v262
    %v269 = vor.u32 %v267, %v268
    %v270 = vshll.u32 2131351028, %v261
    %v271 = vshrl.u32 2102212464, %v262
    %v272 = vor.u32 %v270, %v271
    %v273 = vshll.u32 2102212464, %v261
    %v274 = vshrl.u32 920167782, %v262
    %v275 = vor.u32 %v273, %v274
    %v276 = vshll.u32 920167782, %v261
    %v277 = vshrl.u32 1326507024, %v262
    %v278 = vor.u32 %v276, %v277
    %vm279 = vcmp.lt.s32.totalorder %v260, 1
    %vm280 = vcmp.lt.s32.totalorder %v260, 2
    %vm281 = vcmp.lt.s32.totalorder %v260, 3
    %vm282 = vcmp.lt.s32.totalorder %v260, 4
    %v283 = vsel %vm279, %v263, %v266
    %v284 = vsel %vm282, %v272, 2102212464
    %v285 = vsel %vm281, %v269, %v284
    %v286 = vsel %vm280, %v283, %v285
    %v287 = vsel %vm279, %v266, %v269
    %v288 = vsel %vm282, %v275, 920167782
    %v289 = vsel %vm281, %v272, %v288
    %v290 = vsel %vm280, %v287, %v289
    %v291 = vsel %vm279, %v269, %v272
    %v292 = vsel %vm282, %v278, 1326507024
    %v293 = vsel %vm281, %v275, %v292
    %v294 = vsel %vm280, %v291, %v293
    %v295 = vshll.u32 %v255, 8
    %v296 = vmul.u32.u64.compose %v295, %v294
    %v297 = vextract.low.u32 %v296
    %v298 = vextract.high.u32 %v296
    %v299 = vmul.u32.u64.compose %v295, %v290
    %v300 = vextract.low.u32 %v299
    %v301 = vextract.high.u32 %v299
    %v302 = vmul.u32 %v295, %v286
    %v303 = vadd.s32 %v298, %v300
    %vm304 = vc.u32 %v298, %v300
    %v305 = vadd.s32 %v301, 1
    %v306 = vsel %vm304, %v305, %v301
    %v307 = vadd.s32 %v302, %v306
    %v308 = vadd.s32 %v307, 536870912
    %v309 = vshrl.u32 %v308, 30
    %v310 = vshll.u32 %v309, 30
    %v311 = vsub.s32 %v307, %v310
    %vm312 = vcmp.lt.s32.totalorder %v311, 0
    %v313 = vsub.s32 0, %v311
    %v314 = vsel %vm312, %v313, %v311
    %v315 = vclz %v314
    %v316 = vsub.s32 %v315, 2
    %vm317 = vcmp.gt.s32.totalorder 0, %v316
    %v318 = vsel %vm317, 0, %v316
    %v319 = vsub.s32 32, %v318
    %v320 = vshll.u32 %v311, %v318
    %v321 = vshrl.u32 %v303, %v319
    %v322 = vor.u32 %v320, %v321
    %v323 = vsub.s32 4294967266, %v318
    %v324 = vadd.s32 %v323, 127
    %v325 = vshll.u32 %v324, 23
    %v326 = vor.u32 4788187, %v325
    %v327 = vand.u32 2147483647, %v326
    %v329 = vcvt.s32.f32 %v322
    %v330 = vmul.f32 %v329, %v327
    %v331 = vxor.u32 %v330, 2147483648
    %v332 = vsel %vm249, %v331, %v330
    %v333 = vsub.s32 4, %v309
    %v334 = vsel %vm249, %v333, %v309
    %v335 = vsel %vm248, %v140, %v332
    %v336 = vsel %vm248, 0, %v334
    %v337 = vcosq.f32.pop %v335
    %v338 = vsinq.f32.pop %v335
    %vm339 = vweird.f32 %v140
    %v340 = vadd.s32 %v336, 3
    %v341 = vand.u32 %v340, 3
    %vm342 = vcmp.lt.s32.totalorder %v341, 2
    %vm343 = vcmp.eq.s32.totalorder %v341, 0
    %v344 = vxor.u32 %v338, 2147483648
    %v345 = vsel %vm343, %v337, %v344
    %vm346 = vcmp.eq.s32.totalorder %v341, 2
    %v347 = vxor.u32 %v337, 2147483648
    %v348 = vsel %vm346, %v347, %v338
    %v349 = vsel %vm342, %v345, %v348
    %v350 = vsel %vm339, nan, %v349
    %351 = vst [vmem:[#allocation7] sm:$0xff] %v246
    %352 = vst [vmem:[#allocation7 + $0x8] sm:$0xff] %v350
    // Predicated region
    $region22: #{tpu_custom_call.1} parent=1 // pred_check
      _
    $region23: #{tpu_custom_call.1} parent=1 // pred_check_branch
      %354 = sbr.rel (0) target = $region25
    $region24: #{tpu_custom_call.1} parent=1 // pred_region
      %s356 = ssub.s32 256, 256
      %357 = vsyncadd [#allocation4], %s356
      %s358 = sshll.u32 [#allocation7], 4
      %s359 = int_to_ptr.vmem [resolvable:$true] %s358
      %364 = dma.vmem_to_hbm [thread:$0]  %s359, 256, %s3, [#allocation4], 128, 128, 8
    $region25: #{tpu_custom_call.1} parent=1 // pred_fallthru
      _
    // Predicated region
    $region26: #{tpu_custom_call.1} parent=1 // pred_check
      _
    $region27: #{tpu_custom_call.1} parent=1 // pred_check_branch
      %366 = sbr.rel (0) target = $region29
    $region28: #{tpu_custom_call.1} parent=1 // pred_region
      %367 = dma.done [#allocation4], 256
    $region29: #{tpu_custom_call.1} parent=1 // pred_fallthru
      _
    %368 = vsyncpa [#allocation3], 1
    %369 = vsyncpa [#allocation6], 1
    %370 = vsyncpa [#allocation4], 1

</llo_original>
